<compile_context>
chip_gen: v7x
topology: tpu7x:2x2x1
jax: 0.10.0
libtpu: 0.0.40
codegen_flags: <defaults>
</compile_context>

<pallas_src>
import functools

import jax
import jax.numpy as jnp
from jax.experimental import pallas as pl
from jax.experimental.pallas import tpu as pltpu

_SELU_ALPHA = 1.6732632423543772848170429916717
_SELU_SCALE = 1.0507009873554804934193349852946

_LANE = 128

_SUPPORTED = {
    "relu", "gelu", "elu", "selu", "celu", "tanh", "sigmoid", "hardshrink",
    "hardsigmoid", "tanhshrink", "softshrink", "softsign", "softplus",
    "leaky_relu",
}

# Prefer the documented enum constant; fall back to the accepted string.
_PARALLEL = getattr(pltpu, "PARALLEL", "parallel")


def _apply_activation(x, name):
    """Element-wise activation matching PyTorch nn.* default hyperparameters."""
    one = jnp.asarray(1.0, x.dtype)
    zero = jnp.asarray(0.0, x.dtype)
    if name == "relu":
        return jnp.maximum(x, zero)
    if name == "gelu":
        # PyTorch nn.GELU() default: exact erf formulation.
        inv_sqrt2 = jnp.asarray(0.7071067811865476, x.dtype)
        half = jnp.asarray(0.5, x.dtype)
        return half * x * (one + jax.lax.erf(x * inv_sqrt2))
    if name == "elu":
        # alpha = 1.0; exp(min(x, 0)) keeps the unselected branch finite.
        return jnp.where(x > zero, x, jnp.exp(jnp.minimum(x, zero)) - one)
    if name == "selu":
        alpha = jnp.asarray(_SELU_ALPHA, x.dtype)
        scale = jnp.asarray(_SELU_SCALE, x.dtype)
        return scale * (jnp.maximum(x, zero)
                        + jnp.minimum(zero, alpha * (jnp.exp(jnp.minimum(x, zero)) - one)))
    if name == "celu":
        # alpha = 1.0  ->  max(0,x) + min(0, exp(x) - 1)
        return jnp.maximum(x, zero) + jnp.minimum(zero, jnp.exp(jnp.minimum(x, zero)) - one)
    if name == "tanh":
        return jnp.tanh(x)
    if name == "sigmoid":
        return jax.nn.sigmoid(x)
    if name == "hardshrink":
        lam = jnp.asarray(0.5, x.dtype)
        return jnp.where(jnp.abs(x) > lam, x, zero)
    if name == "hardsigmoid":
        sixth = jnp.asarray(1.0 / 6.0, x.dtype)   # multiply, not divide (VALU)
        half = jnp.asarray(0.5, x.dtype)
        return jnp.clip(x * sixth + half, zero, one)
    if name == "tanhshrink":
        return x - jnp.tanh(x)
    if name == "softshrink":
        lam = jnp.asarray(0.5, x.dtype)
        return jnp.where(x > lam, x - lam, jnp.where(x < -lam, x + lam, zero))
    if name == "softsign":
        return x / (one + jnp.abs(x))
    if name == "softplus":
        # beta = 1, threshold = 20 (linear above threshold, as in PyTorch)
        thr = jnp.asarray(20.0, x.dtype)
        return jnp.where(x > thr, x, jnp.log1p(jnp.exp(jnp.minimum(x, thr))))
    if name == "leaky_relu":
        slope = jnp.asarray(0.01, x.dtype)
        return jnp.where(x >= zero, x, slope * x)
    raise ValueError(f"Invalid activation function: {name}")


def _make_kernel(name):
    def kernel(x_ref, o_ref):
        o_ref[...] = _apply_activation(x_ref[...], name)
    return kernel


def _round_up(n, m):
    return ((n + m - 1) // m) * m


@functools.lru_cache(maxsize=None)
def _block_cfg():
    """Generation-aware (target_block_bytes, vmem_capacity_bytes)."""
    vmem_cap = 128 << 20  # v5e/v6e default assumption
    try:
        info = pltpu.get_tpu_info()
        vmem_cap = int(getattr(info, "vmem_capacity_bytes", vmem_cap))
    except Exception:  # best-effort hardware query; fall back to defaults
        pass
    if vmem_cap <= (64 << 20):
        # v7x-class TC: 64 MiB VMEM but ~3.2 TB/s HBM -> need ~8 MiB blocks
        # to keep the ~0.35 us grid-step overhead under ~10% of the DMA time.
        block_bytes = 8 << 20
    else:
        # v5e/v6e-class: 128 MiB VMEM, 0.8-1.4 TB/s HBM -> 4 MiB blocks sit
        # at the roofline (double-buffered in+out = 16 MiB of VMEM).
        block_bytes = 4 << 20
    return block_bytes, vmem_cap


def _elementwise_pallas(x2, name, donate):
    """Run the activation over a lane-dense (rows, 128) slab."""
    rows, lane = x2.shape
    itemsize = jnp.dtype(x2.dtype).itemsize
    # Sublane-packing multiple: 8 rows/vreg for 32-bit, 16 for bf16, 32 for i8.
    sub = 8 * max(1, 4 // itemsize)

    block_bytes, vmem_cap = _block_cfg()
    block_rows = max(sub, (block_bytes // (lane * itemsize)) // sub * sub)
    if rows <= sub:
        # Tiny slab: one full-extent block (satisfies the tiling rule exactly).
        block_rows = rows
    elif block_rows >= rows:
        # Would collapse to a 1-step grid; split into >=2 sublane-aligned
        # blocks so v7x's two TensorCores both get work (no-op cost on
        # single-TC v5e/v6e).
        block_rows = _round_up(pl.cdiv(rows, 2), sub)

    grid = (pl.cdiv(rows, block_rows),)  # partial trailing block handled by Pallas

    # Double-buffered in + out blocks plus headroom; above v5e's 16 MiB scoped
    # default, comfortably below v7x's 64 MiB physical VMEM.
    block_actual = block_rows * lane * itemsize
    vmem_limit = int(min(int(vmem_cap * 0.6),
                         max(16 << 20, 4 * block_actual + (8 << 20))))

    kwargs = {}
    if donate:
        kwargs["input_output_aliases"] = {0: 0}

    return pl.pallas_call(
        _make_kernel(name),
        out_shape=jax.ShapeDtypeStruct((rows, lane), x2.dtype),
        grid=grid,
        in_specs=[pl.BlockSpec((block_rows, lane), lambda i: (i, 0))],
        out_specs=pl.BlockSpec((block_rows, lane), lambda i: (i, 0)),
        compiler_params=pltpu.CompilerParams(
            dimension_semantics=(_PARALLEL,),
            vmem_limit_bytes=vmem_limit),
        **kwargs,
    )(x2)


@functools.partial(jax.jit, static_argnames=("activation", "donate"))
def activation_forward(x, activation: str, donate: bool = False):
    """Pallas-backed equivalent of Activation(activation)(x). Any input shape."""
    name = activation.lower()
    if name not in _SUPPORTED:
        raise ValueError(f"Invalid activation function: {activation}")
    orig_shape = x.shape
    n = x.size

    if n % _LANE == 0:
        # Common case: flattened size divides 128 -> no pad, no slice, no
        # concat — just a (free) reshape to a lane-dense 2D slab.
        out2 = _elementwise_pallas(x.reshape(-1, _LANE), name, donate)
        return out2.reshape(orig_shape)

    # Irregular size: run the kernel on the lane-aligned prefix and compute
    # the (<128-element) remainder with plain jnp — no full-tensor pad and no
    # slice of padded garbage.
    n_main = (n // _LANE) * _LANE
    flat = x.reshape(-1)
    tail = _apply_activation(flat[n_main:], name)
    if n_main == 0:
        return tail.reshape(orig_shape)
    main = _elementwise_pallas(flat[:n_main].reshape(-1, _LANE), name, donate)
    return jnp.concatenate([main.reshape(-1), tail]).reshape(orig_shape)


def _ref_activation(x, name):
    """Pure-JAX reference (same math, outside Pallas) for sanity checking."""
    return _apply_activation(x, name.lower())


if __name__ == "__main__":
    key = jax.random.PRNGKey(0)
    acts = ["relu", "gelu", "elu", "selu", "celu", "tanh", "sigmoid",
            "hardshrink", "hardsigmoid", "tanhshrink", "softshrink",
            "softsign", "softplus", "leaky_relu"]

    ok = True

    # Shape consistent with a typical NCHW feature map fed to the module.
    x = jax.random.normal(key, (2, 4, 16, 16), dtype=jnp.float32) * 2.0
    for a in acts:
        y = jax.block_until_ready(activation_forward(x, a))
        y_ref = _ref_activation(x, a)
        if y.shape != x.shape or y.dtype != x.dtype:
            ok = False
        if not jnp.allclose(y, y_ref, atol=1e-5, rtol=1e-5):
            ok = False

    # Size < 128: entire tensor goes through the plain-jnp remainder path.
    x_odd = jax.random.normal(jax.random.PRNGKey(1), (3, 37), dtype=jnp.float32)
    for a in ("gelu", "softplus"):
        y = jax.block_until_ready(activation_forward(x_odd, a))
        if not jnp.allclose(y, _ref_activation(x_odd, a), atol=1e-5, rtol=1e-5):
            ok = False

    # Irregular size >= 128: kernel on the lane-aligned prefix + jnp tail.
    x_mix = jax.random.normal(jax.random.PRNGKey(3), (5, 131), dtype=jnp.float32)
    for a in ("elu", "leaky_relu"):
        y = jax.block_until_ready(activation_forward(x_mix, a))
        if y.shape != x_mix.shape:
            ok = False
        if not jnp.allclose(y, _ref_activation(x_mix, a), atol=1e-5, rtol=1e-5):
            ok = False

    # Larger tensor exercises the multi-step grid (>=2 parallel blocks).
    x_big = jax.random.normal(jax.random.PRNGKey(2), (4, 4, 256, 256),
                              dtype=jnp.float32)
    for a in ("relu", "sigmoid"):
        y = jax.block_until_ready(activation_forward(x_big, a))
        if not jnp.allclose(y, _ref_activation(x_big, a), atol=1e-5, rtol=1e-5):
            ok = False

    # Optional in-place (aliased) variant.
    y = jax.block_until_ready(activation_forward(x, "gelu", donate=True))
    if not jnp.allclose(y, _ref_activation(x, "gelu"), atol=1e-5, rtol=1e-5):
        ok = False

    if ok:
        print("KERNEL_OK")
    else:
        print("KERNEL_MISMATCH")
</pallas_src>

<mosaic_0001>
module attributes {stable_mosaic.version = 11 : i64} {
  func.func @kernel(%arg0: i32, %arg1: memref<8x128xf32, #tpu.memory_space<vmem>>, %arg2: memref<8x128xf32, #tpu.memory_space<vmem>>) attributes {dimension_semantics = [#tpu.dimension_semantics<parallel>], iteration_bounds = array<i64: 2>, scalar_prefetch = 0 : i64, scratch_operands = 0 : i64, tpu.core_type = #tpu.core_type<tc>, window_params = [{transform_indices = @transform_0, window_bounds = array<i64: 8, 128>}, {transform_indices = @transform_1, window_bounds = array<i64: 8, 128>}]} {
    %c0 = arith.constant 0 : index
    %c0_0 = arith.constant 0 : index
    %0 = vector.load %arg1[%c0, %c0_0] : memref<8x128xf32, #tpu.memory_space<vmem>>, vector<8x128xf32>
    %cst = arith.constant 0.000000e+00 : f32
    %1 = vector.broadcast %cst : f32 to vector<8x128xf32>
    %2 = arith.maximumf %0, %1 : vector<8x128xf32>
    %c0_1 = arith.constant 0 : index
    %c0_2 = arith.constant 0 : index
    %3 = vector.load %arg2[%c0_1, %c0_2] : memref<8x128xf32, #tpu.memory_space<vmem>>, vector<8x128xf32>
    tpu.vector_store %arg2[%c0_1, %c0_2], %2 {strides = array<i32>} : memref<8x128xf32, #tpu.memory_space<vmem>>, vector<8x128xf32>,
    return
  }
  func.func @transform_0(%arg0: i32) -> (i32, i32) {
    %c0_i32 = arith.constant 0 : i32
    %c0_i32_0 = arith.constant 0 : i32
    return %arg0, %c0_i32 : i32, i32
  }
  func.func @transform_1(%arg0: i32) -> (i32, i32) {
    %c0_i32 = arith.constant 0 : i32
    %c0_i32_0 = arith.constant 0 : i32
    return %arg0, %c0_i32 : i32, i32
  }
}

</mosaic_0001>

<llo_original>
// kernel: activation_forward.1
$region0: #{activation_forward.1}
  #allocation0 [shape = 'u32[]', space=smem, size = 0x4, offset = 0x4, fixed_abs, tag = 'smem constant byte address 0x4 - core index']
  #allocation1 [shape = 'u32[144,128]{1,0:T(1,128)}', space=vmem, size = 0x12000, scoped, tag = 'internal scratch']
  %s0 = inlined_call_operand.vmem [shape: f32[16,128], index: 0, kind: input, shape index: {}]
  %s1 = inlined_call_operand.vmem [shape: f32[16,128], index: 1, kind: output, shape index: {}]
  %s2 = sld [smem:[#allocation0]]
  $region37: #{activation_forward.1} parent=0
    _
  %s4 = ssub.s32 1, %s2
  %s5 = scalar_select 0, %s4, %s2
  loop: start=0, step=1, limit=4
  $region2: #{activation_forward.1} parent=0 // loop_pre_header
    _
  $region3: #{activation_forward.1} parent=0 // loop_header
    %s7 = sphi 0, %s11
    %p8 = scmp.ge.s32.totalorder %s7, 4
    %s17 = sphi 0, %s19
    %s20 = sphi 0, %s17
    %s21 = sphi 0, %s20
    %s37 = sphi 0, %s21
    %s43 = sphi 0, %s45
    %s46 = sphi 0, %s43
    %s47 = sphi 0, %s46
    %s63 = sphi 0, %s47
  $region4: #{activation_forward.1} parent=0 // loop_header_branch
    %10 = sbr.rel (%p8) target = $region8
  $region5: #{activation_forward.1} parent=0 // loop_body
    %s12 = ssub.s32 %s7, 1
    %s13 = ssub.s32 %s7, 2
    %s14 = sadd.s32 %s7, 1
    %s15 = ssub.s32 %s7, %s14
    %p16 = scmp.eq.s32.totalorder %s15, 0
    %s18 = sadd.s32 %s17, 1
    %s19 = scalar_select %p16, %s17, %s18
    %p22 = pneg %p16
    %p23 = scmp.eq.s32.totalorder %s7, 1
    %p24 = por %p22, %p23
    %p25 = scmp.ne.s32.totalorder %s17, %s20
    %p26 = scmp.eq.s32.totalorder %s7, 0
    %p27 = por %p25, %p26
    %p28 = scmp.ne.s32.totalorder %s17, %s20
    %p29 = scmp.eq.s32.totalorder %s12, 1
    %p30 = por %p28, %p29
    %p31 = scmp.ne.s32.totalorder %s20, %s21
    %p32 = scmp.eq.s32.totalorder %s12, 0
    %p33 = por %p31, %p32
    %p34 = scmp.ne.s32.totalorder %s20, %s21
    %p35 = scmp.eq.s32.totalorder %s13, 1
    %p36 = por %p34, %p35
    %p38 = scmp.ne.s32.totalorder %s21, %s37
    %p39 = scmp.eq.s32.totalorder %s13, 0
    %p40 = por %p38, %p39
    %s41 = ssub.s32 %s7, %s14
    %p42 = scmp.eq.s32.totalorder %s41, 0
    %s44 = sadd.s32 %s43, 1
    %s45 = scalar_select %p42, %s43, %s44
    %p48 = pneg %p42
    %p49 = scmp.eq.s32.totalorder %s7, 1
    %p50 = por %p48, %p49
    %p51 = scmp.ne.s32.totalorder %s43, %s46
    %p52 = scmp.eq.s32.totalorder %s7, 0
    %p53 = por %p51, %p52
    %p54 = scmp.ne.s32.totalorder %s43, %s46
    %p55 = scmp.eq.s32.totalorder %s12, 1
    %p56 = por %p54, %p55
    %p57 = scmp.ne.s32.totalorder %s46, %s47
    %p58 = scmp.eq.s32.totalorder %s12, 0
    %p59 = por %p57, %p58
    %p60 = scmp.ne.s32.totalorder %s46, %s47
    %p61 = scmp.eq.s32.totalorder %s13, 1
    %p62 = por %p60, %p61
    %p64 = scmp.ne.s32.totalorder %s47, %s63
    %p65 = scmp.eq.s32.totalorder %s13, 0
    %p66 = por %p64, %p65
    %p67 = scmp.le.s32.totalorder 1, %s7
    %p68 = scmp.lt.s32.totalorder %s7, 3
    %p69 = pnand %p67, %p68
    %p70 = pneg %p69
    // Predicated region
    $region9: #{activation_forward.1} parent=5 // pred_check
      _
    $region10: #{activation_forward.1} parent=5 // pred_check_branch
      %72 = sbr.rel (%p69) target = $region12
    $region11: #{activation_forward.1} parent=5 // pred_region
      %s73 = ssub.s32 %s7, 1
    $region12: #{activation_forward.1} parent=5 // pred_fallthru
      _
    %p74 = scmp.lt.s32.totalorder %s7, 2
    // Predicated region
    $region13: #{activation_forward.1} parent=5 // pred_check
      %p75 = pneg %p74
    $region14: #{activation_forward.1} parent=5 // pred_check_branch
      %77 = sbr.rel (%p75) target = $region16
    $region15: #{activation_forward.1} parent=5 // pred_region
      // Predicated region
      $region17: #{activation_forward.1} parent=15 // pred_check
        %p78 = pneg %p27
      $region18: #{activation_forward.1} parent=15 // pred_check_branch
        %80 = sbr.rel (%p78) target = $region20
      $region19: #{activation_forward.1} parent=15 // pred_region
        %p81 = scmp.lt.s32.totalorder %s7, 1
        %s82 = scalar_select %p81, %s7, 1
        %s83 = smul.addr %s82, 8
        %s84 = scalar_lea.vmem %s0, %s83
      $region20: #{activation_forward.1} parent=15 // pred_fallthru
        _
    $region16: #{activation_forward.1} parent=5 // pred_fallthru
      _
    %p85 = scmp.le.s32.totalorder 1, %s7
    %p86 = scmp.lt.s32.totalorder %s7, 3
    %p87 = pnand %p85, %p86
    %p88 = pneg %p87
    // Predicated region
    $region21: #{activation_forward.1} parent=5 // pred_check
      _
    $region22: #{activation_forward.1} parent=5 // pred_check_branch
      %90 = sbr.rel (%p87) target = $region24
    $region23: #{activation_forward.1} parent=5 // pred_region
      %s91 = ssub.s32 %s7, 1
      %p92 = scmp.lt.s32.totalorder %s12, 1
      %s93 = scalar_select %p92, %s12, 1
      %s94 = smul.addr %s93, 8
      %s95 = scalar_lea.vmem %s0, %s94
      %p96 = pneg %p33
      %p97 = pneg %p30
      %p98 = pneg %p59
      %p99 = pneg %p56
      %p100 = scmp.lt.s32.totalorder %s12, 1
      %s101 = scalar_select %p100, %s12, 1
      %s102 = smul.addr %s101, 8
      %s103 = scalar_lea.vmem %s1, %s102
      %p104 = scmp.lt.s32.totalorder %s12, 1
      %s105 = scalar_select %p104, %s12, 1
      %s106 = smul.addr %s105, 8
      %s107 = scalar_lea.vmem %s0, %s106
      %p108 = scmp.lt.s32.totalorder %s12, 1
      %s109 = scalar_select %p108, %s12, 1
      %s110 = smul.addr %s109, 8
      %s111 = scalar_lea.vmem %s1, %s110
      %v112 = vld [vmem:[%s107] sm:$0xff]
      %v113 = vmax.f32 %v112, 0.0
      %114 = vst [vmem:[%s111] sm:$0xff] %v113
      %p115 = scmp.lt.s32.totalorder %s12, 1
      %s116 = scalar_select %p115, %s12, 1
      %s117 = smul.addr %s116, 8
      %s118 = scalar_lea.vmem %s1, %s117
      // Predicated region
      $region25: #{activation_forward.1} parent=23 // pred_check
        %p119 = pneg %p56
      $region26: #{activation_forward.1} parent=23 // pred_check_branch
        %121 = sbr.rel (%p119) target = $region28
      $region27: #{activation_forward.1} parent=23 // pred_region
        _
      $region28: #{activation_forward.1} parent=23 // pred_fallthru
        _
    $region24: #{activation_forward.1} parent=5 // pred_fallthru
      _
    %p122 = scmp.le.s32.totalorder 2, %s7
    // Predicated region
    $region29: #{activation_forward.1} parent=5 // pred_check
      %p123 = pneg %p122
    $region30: #{activation_forward.1} parent=5 // pred_check_branch
      %125 = sbr.rel (%p123) target = $region32
    $region31: #{activation_forward.1} parent=5 // pred_region
      %s126 = ssub.s32 %s7, 2
      // Predicated region
      $region33: #{activation_forward.1} parent=31 // pred_check
        %p127 = pneg %p62
      $region34: #{activation_forward.1} parent=31 // pred_check_branch
        %129 = sbr.rel (%p127) target = $region36
      $region35: #{activation_forward.1} parent=31 // pred_region
        %p130 = scmp.lt.s32.totalorder %s13, 1
        %s131 = scalar_select %p130, %s13, 1
        %s132 = smul.addr %s131, 8
        %s133 = scalar_lea.vmem %s1, %s132
      $region36: #{activation_forward.1} parent=31 // pred_fallthru
        _
    $region32: #{activation_forward.1} parent=5 // pred_fallthru
      _
  $region6: #{activation_forward.1} parent=0 // loop_footer
    %s11 = sadd.s32 1, %s7
  $region7: #{activation_forward.1} parent=0 // loop_footer_branch
    %6 = sbr.rel target = $region3
  $region8: #{activation_forward.1} parent=0 // loop_exit
    _

</llo_original>
